<compile_context>
chip_gen: v7x
topology: tpu7x:2x2x1
jax: 0.10.0
libtpu: 0.0.40
codegen_flags: <defaults>
</compile_context>

<pallas_src>
import functools
import math

import jax
import jax.numpy as jnp
from jax import lax
from jax.experimental import pallas as pl
from jax.experimental.pallas import tpu as pltpu

BN_EPS = 1e-5
LANE = 128


def _round_up(n, m):
    return ((n + m - 1) // m) * m


def _pick_unroll(n_layers, max_unroll=4):
    """Largest k <= max_unroll that divides n_layers (layers fused per grid step)."""
    if n_layers <= 0:
        return 0
    k = min(max_unroll, n_layers)
    while n_layers % k:
        k -= 1
    return k


def _feature_encoder_kernel(
    x_ref,        # (B, Fp)        f32 padded input activations
    w_ref,        # (k, Fp, Fp)    bf16 hidden weights for this step, (in, out) layout
    gamma_ref,    # (k, 1, Fp)     f32 BN gamma
    beta_ref,     # (k, 1, Fp)     f32 BN beta
    head_w_ref,   # (Fp, 2LATp)    bf16 fused [mu | logvar] head weights (in, out)
    head_b_ref,   # (1, 2LATp)     f32 fused head bias
    out_ref,      # (B, 2LATp)     f32 fused, lane-dense output
    h_ref,        # scratch (B, Fp) f32 activations carried across grid steps
    *,
    layers_per_step: int,
):
    step = pl.program_id(0)

    @pl.when(step == 0)
    def _():
        h_ref[...] = x_ref[...]

    if layers_per_step > 0:  # static: hidden-layer body only exists when n_layers > 0
        h = h_ref[...]
        for i in range(layers_per_step):  # static unroll, h stays in registers
            # Linear (bias=False): bf16 MXU matmul, f32 accumulate.
            z = jnp.dot(h.astype(jnp.bfloat16), w_ref[i],
                        preferred_element_type=jnp.float32)

            # BatchNorm1d (training-mode batch stats, biased variance), folded into a
            # single scale/shift sweep; fused with Swish.
            mean = jnp.mean(z, axis=0, keepdims=True)                       # (1, Fp)
            var = jnp.mean((z - mean) * (z - mean), axis=0, keepdims=True)  # (1, Fp)
            scale = gamma_ref[i] * lax.rsqrt(var + BN_EPS)
            shift = beta_ref[i] - mean * scale
            z = z * scale + shift
            h = z * jax.nn.sigmoid(z)  # Swish
        h_ref[...] = h

    @pl.when(step == pl.num_programs(0) - 1)
    def _():
        h = h_ref[...]
        out = jnp.dot(h.astype(jnp.bfloat16), head_w_ref[...],
                      preferred_element_type=jnp.float32)
        out_ref[...] = out + head_b_ref[...]


def init_params(key, n_layers, in_features, latent_space_size,
                mu_weight_std=0.001, mu_bias=0.0,
                logvar_weight_std=0.01, logvar_bias=0.0):
    """Raw f32 params in PyTorch layout (Linear weight = (out, in))."""
    k_w, k_mu, k_lv = jax.random.split(key, 3)
    L = max(n_layers, 1)

    bound = 1.0 / math.sqrt(in_features)
    w = jax.random.uniform(k_w, (L, in_features, in_features),
                           minval=-bound, maxval=bound, dtype=jnp.float32)
    gamma = jnp.ones((L, 1, in_features), jnp.float32)
    beta = jnp.zeros((L, 1, in_features), jnp.float32)

    mu_w = mu_weight_std * jax.random.normal(
        k_mu, (latent_space_size, in_features), jnp.float32)
    lv_w = logvar_weight_std * jax.random.normal(
        k_lv, (latent_space_size, in_features), jnp.float32)
    mu_b = jnp.full((latent_space_size,), mu_bias, jnp.float32)
    lv_b = jnp.full((latent_space_size,), logvar_bias, jnp.float32)

    return dict(w=w, gamma=gamma, beta=beta,
                mu_w=mu_w, mu_b=mu_b, lv_w=lv_w, lv_b=lv_b)


def pack_params(raw, n_layers, in_features, latent):
    """One-time: transpose, zero-pad to lane multiples, cast weights to bf16,
    fuse mu/logvar heads into a single (Fp, 2*LATp) matmul."""
    Fp = _round_up(in_features, LANE)
    latp2 = _round_up(2 * latent, LANE)
    pad_f = Fp - in_features
    pad_l = latp2 - 2 * latent

    # Hidden weights: (out, in) -> (in, out), zero-pad, bf16.
    w_t = jnp.swapaxes(raw["w"], -1, -2)
    w_t = jnp.pad(w_t, ((0, 0), (0, pad_f), (0, pad_f))).astype(jnp.bfloat16)

    gamma = jnp.pad(raw["gamma"], ((0, 0), (0, 0), (0, pad_f)), constant_values=1.0)
    beta = jnp.pad(raw["beta"], ((0, 0), (0, 0), (0, pad_f)))

    # Fused heads: concat along the output dim, transpose to (in, out), pad, bf16.
    head_w = jnp.concatenate([raw["mu_w"].T, raw["lv_w"].T], axis=1)   # (F, 2*LAT)
    head_w = jnp.pad(head_w, ((0, pad_f), (0, pad_l))).astype(jnp.bfloat16)
    head_b = jnp.pad(jnp.concatenate([raw["mu_b"], raw["lv_b"]]), (0, pad_l))[None, :]

    return dict(w_t=w_t, gamma=gamma, beta=beta, head_w_t=head_w, head_b=head_b,
                F=in_features, Fp=Fp, latent=latent, latp2=latp2)


def feature_encoder_forward(x, p, *, n_layers):
    """x: (B, F) float32. Returns (mu, logvar), each (B, latent)."""
    B, F = x.shape
    Fp, latp2, latent = p["Fp"], p["latp2"], p["latent"]
    x_pad = jnp.pad(x.astype(jnp.float32), ((0, 0), (0, Fp - F)))

    k = _pick_unroll(n_layers)
    if n_layers == 0:
        steps, kblk, lps = 1, 1, 0   # one dummy (unused) weight block is streamed
    else:
        steps, kblk, lps = n_layers // k, k, k

    # VMEM budget: streamed weight double buffer + invariants + scratch, with margin.
    req = (2 * kblk * Fp * Fp * 2        # hidden weight double buffer (bf16)
           + 2 * B * Fp * 4              # x buffers
           + B * Fp * 4                  # persistent h scratch
           + 2 * 2 * kblk * Fp * 4       # gamma / beta buffers
           + 2 * Fp * latp2 * 2          # head weights (bf16)
           + 2 * latp2 * 4               # head bias
           + 2 * B * latp2 * 4)          # output
    vmem_limit = int(min(max(2 * req, 16 << 20), 64 << 20))

    kernel = functools.partial(_feature_encoder_kernel, layers_per_step=lps)

    out = pl.pallas_call(
        kernel,
        out_shape=jax.ShapeDtypeStruct((B, latp2), jnp.float32),
        grid_spec=pltpu.PrefetchScalarGridSpec(
            num_scalar_prefetch=0,
            grid=(steps,),
            in_specs=[
                pl.BlockSpec((B, Fp), lambda s: (0, 0)),            # x (invariant)
                pl.BlockSpec((kblk, Fp, Fp), lambda s: (s, 0, 0)),  # k hidden weights
                pl.BlockSpec((kblk, 1, Fp), lambda s: (s, 0, 0)),   # gamma
                pl.BlockSpec((kblk, 1, Fp), lambda s: (s, 0, 0)),   # beta
                pl.BlockSpec((Fp, latp2), lambda s: (0, 0)),        # fused head weights
                pl.BlockSpec((1, latp2), lambda s: (0, 0)),         # fused head bias
            ],
            out_specs=pl.BlockSpec((B, latp2), lambda s: (0, 0)),
            scratch_shapes=[pltpu.VMEM((B, Fp), jnp.float32)],      # persistent h
        ),
        compiler_params=pltpu.CompilerParams(
            dimension_semantics=("arbitrary",),  # layers are sequential through h
            vmem_limit_bytes=vmem_limit,
        ),
    )(x_pad, p["w_t"], p["gamma"], p["beta"], p["head_w_t"], p["head_b"])

    return out[:, :latent], out[:, latent:2 * latent]


def reference_forward(x, raw, *, n_layers):
    """Pure-JAX reference with identical semantics (matmuls use the same bf16-weight /
    f32-accumulate recipe as the kernel so the comparison stays tight)."""
    def bdot(a, b):
        return jnp.dot(a.astype(jnp.bfloat16), b.astype(jnp.bfloat16),
                       preferred_element_type=jnp.float32)

    h = x.astype(jnp.float32)
    for i in range(n_layers):
        z = bdot(h, raw["w"][i].T)
        mean = jnp.mean(z, axis=0, keepdims=True)
        var = jnp.mean((z - mean) ** 2, axis=0, keepdims=True)
        z = (z - mean) * lax.rsqrt(var + BN_EPS)
        z = z * raw["gamma"][i] + raw["beta"][i]
        h = z * jax.nn.sigmoid(z)
    mu = bdot(h, raw["mu_w"].T) + raw["mu_b"][None, :]
    lv = bdot(h, raw["lv_w"].T) + raw["lv_b"][None, :]
    return mu, lv


if __name__ == "__main__":
    N_LAYERS = 2
    IN_FEATURES = 32
    LATENT = 16
    BATCH = 8

    key = jax.random.PRNGKey(0)
    k_x, k_p = jax.random.split(key)
    x = jax.random.normal(k_x, (BATCH, IN_FEATURES), jnp.float32)

    raw = init_params(k_p, N_LAYERS, IN_FEATURES, LATENT)
    packed = pack_params(raw, N_LAYERS, IN_FEATURES, LATENT)

    mu, logvar = feature_encoder_forward(x, packed, n_layers=N_LAYERS)
    jax.block_until_ready((mu, logvar))

    mu_ref, lv_ref = reference_forward(x, raw, n_layers=N_LAYERS)
    assert mu.shape == (BATCH, LATENT) and logvar.shape == (BATCH, LATENT)
    assert jnp.allclose(mu, mu_ref, atol=2e-3, rtol=2e-3), \
        float(jnp.max(jnp.abs(mu - mu_ref)))
    assert jnp.allclose(logvar, lv_ref, atol=2e-3, rtol=2e-3), \
        float(jnp.max(jnp.abs(logvar - lv_ref)))

    print("KERNEL_OK")
</pallas_src>

<mosaic_0001>
module attributes {stable_mosaic.version = 11 : i64} {
  func.func @_feature_encoder_kernel(%arg0: i32, %arg1: memref<8x128xf32, #tpu.memory_space<vmem>>, %arg2: memref<2x128x128xbf16, #tpu.memory_space<vmem>>, %arg3: memref<2x1x128xf32, #tpu.memory_space<vmem>>, %arg4: memref<2x1x128xf32, #tpu.memory_space<vmem>>, %arg5: memref<128x128xbf16, #tpu.memory_space<vmem>>, %arg6: memref<1x128xf32, #tpu.memory_space<vmem>>, %arg7: memref<8x128xf32, #tpu.memory_space<vmem>>, %arg8: memref<8x128xf32, #tpu.memory_space<vmem>>) attributes {dimension_semantics = [#tpu.dimension_semantics<arbitrary>], iteration_bounds = array<i64: 1>, scalar_prefetch = 0 : i64, scratch_operands = 1 : i64, tpu.core_type = #tpu.core_type<tc>, window_params = [{pipeline_mode = #tpu.pipeline_mode<synchronous>, transform_indices = @transform_0, window_bounds = array<i64: 8, 128>}, {transform_indices = @transform_1, window_bounds = array<i64: 2, 128, 128>}, {transform_indices = @transform_2, window_bounds = array<i64: 2, 1, 128>}, {transform_indices = @transform_3, window_bounds = array<i64: 2, 1, 128>}, {pipeline_mode = #tpu.pipeline_mode<synchronous>, transform_indices = @transform_4, window_bounds = array<i64: 128, 128>}, {pipeline_mode = #tpu.pipeline_mode<synchronous>, transform_indices = @transform_5, window_bounds = array<i64: 1, 128>}, {pipeline_mode = #tpu.pipeline_mode<synchronous>, transform_indices = @transform_6, window_bounds = array<i64: 8, 128>}]} {
    %c0_i32 = arith.constant 0 : i32
    %0 = arith.cmpi eq, %arg0, %c0_i32 : i32
    %1 = arith.extui %0 : i1 to i32
    %c0_i32_0 = arith.constant 0 : i32
    %2 = arith.cmpi ne, %1, %c0_i32_0 : i32
    scf.if %2 {
      %c0_36 = arith.constant 0 : index
      %c0_37 = arith.constant 0 : index
      %82 = vector.load %arg1[%c0_36, %c0_37] : memref<8x128xf32, #tpu.memory_space<vmem>>, vector<8x128xf32>
      %c0_38 = arith.constant 0 : index
      %c0_39 = arith.constant 0 : index
      %83 = vector.load %arg8[%c0_38, %c0_39] : memref<8x128xf32, #tpu.memory_space<vmem>>, vector<8x128xf32>
      tpu.vector_store %arg8[%c0_38, %c0_39], %82 {strides = array<i32>} : memref<8x128xf32, #tpu.memory_space<vmem>>, vector<8x128xf32>,
    } else {
    }
    %c0 = arith.constant 0 : index
    %c0_1 = arith.constant 0 : index
    %3 = vector.load %arg8[%c0, %c0_1] : memref<8x128xf32, #tpu.memory_space<vmem>>, vector<8x128xf32>
    %4 = arith.truncf %3 : vector<8x128xf32> to vector<8x128xbf16>
    %c0_2 = arith.constant 0 : index
    %c0_3 = arith.constant 0 : index
    %c0_4 = arith.constant 0 : index
    %5 = vector.load %arg2[%c0_2, %c0_3, %c0_4] : memref<2x128x128xbf16, #tpu.memory_space<vmem>>, vector<1x128x128xbf16>
    %6 = vector.shape_cast %5 : vector<1x128x128xbf16> to vector<128x128xbf16>
    %cst = arith.constant dense<0.000000e+00> : vector<8x128xf32>
    %7 = tpu.matmul %4, %6, %cst {dimension_numbers = #tpu.dot_dimension_numbers<[1], [0], [0], [1], [0, 0, 1, 1], [], []>} : vector<8x128xbf16>, vector<128x128xbf16>, vector<8x128xf32> -> vector<8x128xf32>
    %cst_5 = arith.constant dense<0.000000e+00> : vector<128xf32>
    %8 = vector.multi_reduction <add>, %7, %cst_5 [0] : vector<8x128xf32> to vector<128xf32>
    %9 = vector.shape_cast %8 : vector<128xf32> to vector<1x128xf32>
    %cst_6 = arith.constant 8.000000e+00 : f32
    %10 = vector.broadcast %cst_6 : f32 to vector<1x128xf32>
    %11 = arith.divf %9, %10 : vector<1x128xf32>
    %12 = vector.broadcast %11 : vector<1x128xf32> to vector<8x128xf32>
    %13 = arith.subf %7, %12 : vector<8x128xf32>
    %14 = vector.broadcast %11 : vector<1x128xf32> to vector<8x128xf32>
    %15 = arith.subf %7, %14 : vector<8x128xf32>
    %16 = arith.mulf %13, %15 : vector<8x128xf32>
    %cst_7 = arith.constant dense<0.000000e+00> : vector<128xf32>
    %17 = vector.multi_reduction <add>, %16, %cst_7 [0] : vector<8x128xf32> to vector<128xf32>
    %18 = vector.shape_cast %17 : vector<128xf32> to vector<1x128xf32>
    %cst_8 = arith.constant 8.000000e+00 : f32
    %19 = vector.broadcast %cst_8 : f32 to vector<1x128xf32>
    %20 = arith.divf %18, %19 : vector<1x128xf32>
    %c0_9 = arith.constant 0 : index
    %c0_10 = arith.constant 0 : index
    %c0_11 = arith.constant 0 : index
    %21 = vector.load %arg3[%c0_9, %c0_10, %c0_11] : memref<2x1x128xf32, #tpu.memory_space<vmem>>, vector<1x1x128xf32>
    %22 = vector.shape_cast %21 : vector<1x1x128xf32> to vector<1x128xf32>
    %cst_12 = arith.constant 9.99999974E-6 : f32
    %23 = vector.broadcast %cst_12 : f32 to vector<1x128xf32>
    %24 = arith.addf %20, %23 : vector<1x128xf32>
    %25 = math.rsqrt %24 : vector<1x128xf32>
    %26 = arith.mulf %22, %25 : vector<1x128xf32>
    %c0_13 = arith.constant 0 : index
    %c0_14 = arith.constant 0 : index
    %c0_15 = arith.constant 0 : index
    %27 = vector.load %arg4[%c0_13, %c0_14, %c0_15] : memref<2x1x128xf32, #tpu.memory_space<vmem>>, vector<1x1x128xf32>
    %28 = vector.shape_cast %27 : vector<1x1x128xf32> to vector<1x128xf32>
    %29 = arith.mulf %11, %26 : vector<1x128xf32>
    %30 = arith.subf %28, %29 : vector<1x128xf32>
    %31 = vector.broadcast %26 : vector<1x128xf32> to vector<8x128xf32>
    %32 = arith.mulf %7, %31 : vector<8x128xf32>
    %33 = vector.broadcast %30 : vector<1x128xf32> to vector<8x128xf32>
    %34 = arith.addf %32, %33 : vector<8x128xf32>
    %35 = arith.negf %34 : vector<8x128xf32>
    %36 = math.exp %35 : vector<8x128xf32>
    %cst_16 = arith.constant 1.000000e+00 : f32
    %37 = vector.broadcast %cst_16 : f32 to vector<8x128xf32>
    %38 = arith.addf %37, %36 : vector<8x128xf32>
    %39 = arith.divf %37, %38 : vector<8x128xf32>
    %40 = arith.mulf %34, %39 : vector<8x128xf32>
    %41 = arith.truncf %40 : vector<8x128xf32> to vector<8x128xbf16>
    %c1 = arith.constant 1 : index
    %c0_17 = arith.constant 0 : index
    %c0_18 = arith.constant 0 : index
    %42 = vector.load %arg2[%c1, %c0_17, %c0_18] : memref<2x128x128xbf16, #tpu.memory_space<vmem>>, vector<1x128x128xbf16>
    %43 = vector.shape_cast %42 : vector<1x128x128xbf16> to vector<128x128xbf16>
    %cst_19 = arith.constant dense<0.000000e+00> : vector<8x128xf32>
    %44 = tpu.matmul %41, %43, %cst_19 {dimension_numbers = #tpu.dot_dimension_numbers<[1], [0], [0], [1], [0, 0, 1, 1], [], []>} : vector<8x128xbf16>, vector<128x128xbf16>, vector<8x128xf32> -> vector<8x128xf32>
    %cst_20 = arith.constant dense<0.000000e+00> : vector<128xf32>
    %45 = vector.multi_reduction <add>, %44, %cst_20 [0] : vector<8x128xf32> to vector<128xf32>
    %46 = vector.shape_cast %45 : vector<128xf32> to vector<1x128xf32>
    %cst_21 = arith.constant 8.000000e+00 : f32
    %47 = vector.broadcast %cst_21 : f32 to vector<1x128xf32>
    %48 = arith.divf %46, %47 : vector<1x128xf32>
    %49 = vector.broadcast %48 : vector<1x128xf32> to vector<8x128xf32>
    %50 = arith.subf %44, %49 : vector<8x128xf32>
    %51 = vector.broadcast %48 : vector<1x128xf32> to vector<8x128xf32>
    %52 = arith.subf %44, %51 : vector<8x128xf32>
    %53 = arith.mulf %50, %52 : vector<8x128xf32>
    %cst_22 = arith.constant dense<0.000000e+00> : vector<128xf32>
    %54 = vector.multi_reduction <add>, %53, %cst_22 [0] : vector<8x128xf32> to vector<128xf32>
    %55 = vector.shape_cast %54 : vector<128xf32> to vector<1x128xf32>
    %cst_23 = arith.constant 8.000000e+00 : f32
    %56 = vector.broadcast %cst_23 : f32 to vector<1x128xf32>
    %57 = arith.divf %55, %56 : vector<1x128xf32>
    %c1_24 = arith.constant 1 : index
    %c0_25 = arith.constant 0 : index
    %c0_26 = arith.constant 0 : index
    %58 = vector.load %arg3[%c1_24, %c0_25, %c0_26] : memref<2x1x128xf32, #tpu.memory_space<vmem>>, vector<1x1x128xf32>
    %59 = vector.shape_cast %58 : vector<1x1x128xf32> to vector<1x128xf32>
    %cst_27 = arith.constant 9.99999974E-6 : f32
    %60 = vector.broadcast %cst_27 : f32 to vector<1x128xf32>
    %61 = arith.addf %57, %60 : vector<1x128xf32>
    %62 = math.rsqrt %61 : vector<1x128xf32>
    %63 = arith.mulf %59, %62 : vector<1x128xf32>
    %c1_28 = arith.constant 1 : index
    %c0_29 = arith.constant 0 : index
    %c0_30 = arith.constant 0 : index
    %64 = vector.load %arg4[%c1_28, %c0_29, %c0_30] : memref<2x1x128xf32, #tpu.memory_space<vmem>>, vector<1x1x128xf32>
    %65 = vector.shape_cast %64 : vector<1x1x128xf32> to vector<1x128xf32>
    %66 = arith.mulf %48, %63 : vector<1x128xf32>
    %67 = arith.subf %65, %66 : vector<1x128xf32>
    %68 = vector.broadcast %63 : vector<1x128xf32> to vector<8x128xf32>
    %69 = arith.mulf %44, %68 : vector<8x128xf32>
    %70 = vector.broadcast %67 : vector<1x128xf32> to vector<8x128xf32>
    %71 = arith.addf %69, %70 : vector<8x128xf32>
    %72 = arith.negf %71 : vector<8x128xf32>
    %73 = math.exp %72 : vector<8x128xf32>
    %cst_31 = arith.constant 1.000000e+00 : f32
    %74 = vector.broadcast %cst_31 : f32 to vector<8x128xf32>
    %75 = arith.addf %74, %73 : vector<8x128xf32>
    %76 = arith.divf %74, %75 : vector<8x128xf32>
    %77 = arith.mulf %71, %76 : vector<8x128xf32>
    %c0_32 = arith.constant 0 : index
    %c0_33 = arith.constant 0 : index
    %78 = vector.load %arg8[%c0_32, %c0_33] : memref<8x128xf32, #tpu.memory_space<vmem>>, vector<8x128xf32>
    tpu.vector_store %arg8[%c0_32, %c0_33], %77 {strides = array<i32>} : memref<8x128xf32, #tpu.memory_space<vmem>>, vector<8x128xf32>,
    %c0_i32_34 = arith.constant 0 : i32
    %79 = arith.cmpi eq, %arg0, %c0_i32_34 : i32
    %80 = arith.extui %79 : i1 to i32
    %c0_i32_35 = arith.constant 0 : i32
    %81 = arith.cmpi ne, %80, %c0_i32_35 : i32
    scf.if %81 {
      %c0_36 = arith.constant 0 : index
      %c0_37 = arith.constant 0 : index
      %82 = vector.load %arg8[%c0_36, %c0_37] : memref<8x128xf32, #tpu.memory_space<vmem>>, vector<8x128xf32>
      %83 = arith.truncf %82 : vector<8x128xf32> to vector<8x128xbf16>
      %c0_38 = arith.constant 0 : index
      %c0_39 = arith.constant 0 : index
      %84 = vector.load %arg5[%c0_38, %c0_39] : memref<128x128xbf16, #tpu.memory_space<vmem>>, vector<128x128xbf16>
      %cst_40 = arith.constant dense<0.000000e+00> : vector<8x128xf32>
      %85 = tpu.matmul %83, %84, %cst_40 {dimension_numbers = #tpu.dot_dimension_numbers<[1], [0], [0], [1], [0, 0, 1, 1], [], []>} : vector<8x128xbf16>, vector<128x128xbf16>, vector<8x128xf32> -> vector<8x128xf32>
      %c0_41 = arith.constant 0 : index
      %c0_42 = arith.constant 0 : index
      %86 = vector.load %arg6[%c0_41, %c0_42] : memref<1x128xf32, #tpu.memory_space<vmem>>, vector<1x128xf32>
      %87 = vector.broadcast %86 : vector<1x128xf32> to vector<8x128xf32>
      %88 = arith.addf %85, %87 : vector<8x128xf32>
      %c0_43 = arith.constant 0 : index
      %c0_44 = arith.constant 0 : index
      %89 = vector.load %arg7[%c0_43, %c0_44] : memref<8x128xf32, #tpu.memory_space<vmem>>, vector<8x128xf32>
      tpu.vector_store %arg7[%c0_43, %c0_44], %88 {strides = array<i32>} : memref<8x128xf32, #tpu.memory_space<vmem>>, vector<8x128xf32>,
    } else {
    }
    return
  }
  func.func @transform_0(%arg0: i32) -> (i32, i32) {
    %c0_i32 = arith.constant 0 : i32
    %c0_i32_0 = arith.constant 0 : i32
    %c0_i32_1 = arith.constant 0 : i32
    return %c0_i32, %c0_i32_0 : i32, i32
  }
  func.func @transform_1(%arg0: i32) -> (i32, i32, i32) {
    %c0_i32 = arith.constant 0 : i32
    %c0_i32_0 = arith.constant 0 : i32
    %c0_i32_1 = arith.constant 0 : i32
    return %arg0, %c0_i32, %c0_i32_0 : i32, i32, i32
  }
  func.func @transform_2(%arg0: i32) -> (i32, i32, i32) {
    %c0_i32 = arith.constant 0 : i32
    %c0_i32_0 = arith.constant 0 : i32
    %c0_i32_1 = arith.constant 0 : i32
    return %arg0, %c0_i32, %c0_i32_0 : i32, i32, i32
  }
  func.func @transform_3(%arg0: i32) -> (i32, i32, i32) {
    %c0_i32 = arith.constant 0 : i32
    %c0_i32_0 = arith.constant 0 : i32
    %c0_i32_1 = arith.constant 0 : i32
    return %arg0, %c0_i32, %c0_i32_0 : i32, i32, i32
  }
  func.func @transform_4(%arg0: i32) -> (i32, i32) {
    %c0_i32 = arith.constant 0 : i32
    %c0_i32_0 = arith.constant 0 : i32
    %c0_i32_1 = arith.constant 0 : i32
    return %c0_i32, %c0_i32_0 : i32, i32
  }
  func.func @transform_5(%arg0: i32) -> (i32, i32) {
    %c0_i32 = arith.constant 0 : i32
    %c0_i32_0 = arith.constant 0 : i32
    %c0_i32_1 = arith.constant 0 : i32
    return %c0_i32, %c0_i32_0 : i32, i32
  }
  func.func @transform_6(%arg0: i32) -> (i32, i32) {
    %c0_i32 = arith.constant 0 : i32
    %c0_i32_0 = arith.constant 0 : i32
    %c0_i32_1 = arith.constant 0 : i32
    return %c0_i32, %c0_i32_0 : i32, i32
  }
}

</mosaic_0001>

<llo_original>
// kernel: tpu_custom_call.1
$region0: #{tpu_custom_call.1}
  #allocation0 [shape = 'u32[]', space=smem, size = 0x4, offset = 0x4, fixed_abs, tag = 'smem constant byte address 0x4 - core index']
  #allocation1 [shape = 'u32[144,128]{1,0:T(1,128)}', space=vmem, size = 0x12000, scoped, tag = 'internal scratch']
  #allocation2 [shape = 'f32[8,128]{1,0:T(8,128)}', space=vmem, size = 0x1000, scoped, tag = 'scratch operand']
  %s0 = inlined_call_operand.hbm [shape: f32[8,128], index: 0, kind: input, shape index: {}]
  %s1 = inlined_call_operand.hbm [shape: bf16[2,128,128], index: 1, kind: input, shape index: {}]
  %s2 = inlined_call_operand.vmem [shape: f32[2,1,128], index: 2, kind: input, shape index: {}]
  %s3 = inlined_call_operand.vmem [shape: f32[2,1,128], index: 3, kind: input, shape index: {}]
  %s4 = inlined_call_operand.hbm [shape: bf16[128,128], index: 4, kind: input, shape index: {}]
  %s5 = inlined_call_operand.vmem [shape: f32[1,128], index: 5, kind: input, shape index: {}]
  %s6 = inlined_call_operand.hbm [shape: f32[8,128], index: 6, kind: output, shape index: {}]
  %s7 = sld [smem:[#allocation0]]
  $region54: #{tpu_custom_call.1} parent=0
    _
  %s9 = ssub.s32 1, %s7
  %s10 = scalar_select 0, %s9, %s7
  $region1: #{tpu_custom_call.1} parent=0
    #allocation3 [shape = 'u8[4096]{0}', space=vmem, size = 0x1000, scoped, tag = 'input window, operand 0, single buffered']
    #allocation4 [shape = 's32[1]{0}', space=sflag, size = 0x4, scoped, tag = 'scoped memory for tpu_custom_call.1']
    #allocation5 [shape = 's32[1]{0}', space=sflag, size = 0x4, scoped, tag = 'scoped memory for tpu_custom_call.1']
    #allocation6 [shape = 'u8[65536]{0}', space=vmem, size = 0x10000, scoped, tag = 'input window, operand 1, single buffered']
    #allocation7 [shape = 's32[1]{0}', space=sflag, size = 0x4, scoped, tag = 'scoped memory for tpu_custom_call.1']
    #allocation8 [shape = 'u8[32768]{0}', space=vmem, size = 0x8000, scoped, tag = 'input window, operand 4, single buffered']
    #allocation9 [shape = 'u8[4096]{0}', space=vmem, size = 0x1000, scoped, tag = 'output window, operand 0, single buffered']
    %11 = vsyncpa [#allocation4], 0
    %12 = vsyncpa [#allocation7], 0
    %13 = vsyncpa [#allocation5], 0
    // Predicated region
    $region2: #{tpu_custom_call.1} parent=1 // pred_check
      _
    $region3: #{tpu_custom_call.1} parent=1 // pred_check_branch
      %15 = sbr.rel (0) target = $region5
    $region4: #{tpu_custom_call.1} parent=1 // pred_region
      %s17 = ssub.s32 128, 128
      %18 = vsyncadd [#allocation4], %s17
      %s20 = sshll.u32 [#allocation3], 4
      %s21 = int_to_ptr.vmem [resolvable:$true] %s20
      %23 = dma.hbm_to_vmem [thread:$0]  %s0, 128, %s21, [#allocation4]
    $region5: #{tpu_custom_call.1} parent=1 // pred_fallthru
      _
    // Predicated region
    $region6: #{tpu_custom_call.1} parent=1 // pred_check
      _
    $region7: #{tpu_custom_call.1} parent=1 // pred_check_branch
      %25 = sbr.rel (0) target = $region9
    $region8: #{tpu_custom_call.1} parent=1 // pred_region
      %s27 = ssub.s32 2048, 2048
      %28 = vsyncadd [#allocation7], %s27
      %s29 = sshll.u32 [#allocation6], 4
      %s30 = int_to_ptr.vmem [resolvable:$true] %s29
      %35 = dma.hbm_to_vmem [thread:$0]  %s1, 2048, %s30, [#allocation7], 64, 64, 4
    $region9: #{tpu_custom_call.1} parent=1 // pred_fallthru
      _
    // Predicated region
    $region10: #{tpu_custom_call.1} parent=1 // pred_check
      _
    $region11: #{tpu_custom_call.1} parent=1 // pred_check_branch
      %37 = sbr.rel (0) target = $region13
    $region12: #{tpu_custom_call.1} parent=1 // pred_region
      _
    $region13: #{tpu_custom_call.1} parent=1 // pred_fallthru
      _
    // Predicated region
    $region14: #{tpu_custom_call.1} parent=1 // pred_check
      _
    $region15: #{tpu_custom_call.1} parent=1 // pred_check_branch
      %39 = sbr.rel (0) target = $region17
    $region16: #{tpu_custom_call.1} parent=1 // pred_region
      _
    $region17: #{tpu_custom_call.1} parent=1 // pred_fallthru
      _
    // Predicated region
    $region18: #{tpu_custom_call.1} parent=1 // pred_check
      _
    $region19: #{tpu_custom_call.1} parent=1 // pred_check_branch
      %41 = sbr.rel (0) target = $region21
    $region20: #{tpu_custom_call.1} parent=1 // pred_region
      %s43 = ssub.s32 1024, 1024
      %44 = vsyncadd [#allocation7], %s43
      %s45 = sshll.u32 [#allocation8], 4
      %s46 = int_to_ptr.vmem [resolvable:$true] %s45
      %51 = dma.hbm_to_vmem [thread:$0]  %s4, 1024, %s46, [#allocation7], 64, 64, 4
    $region21: #{tpu_custom_call.1} parent=1 // pred_fallthru
      _
    // Predicated region
    $region22: #{tpu_custom_call.1} parent=1 // pred_check
      _
    $region23: #{tpu_custom_call.1} parent=1 // pred_check_branch
      %53 = sbr.rel (0) target = $region25
    $region24: #{tpu_custom_call.1} parent=1 // pred_region
      _
    $region25: #{tpu_custom_call.1} parent=1 // pred_fallthru
      _
    // Predicated region
    $region26: #{tpu_custom_call.1} parent=1 // pred_check
      _
    $region27: #{tpu_custom_call.1} parent=1 // pred_check_branch
      %55 = sbr.rel (0) target = $region29
    $region28: #{tpu_custom_call.1} parent=1 // pred_region
      %56 = dma.done [#allocation4], 128
    $region29: #{tpu_custom_call.1} parent=1 // pred_fallthru
      _
    // Predicated region
    $region30: #{tpu_custom_call.1} parent=1 // pred_check
      _
    $region31: #{tpu_custom_call.1} parent=1 // pred_check_branch
      %58 = sbr.rel (0) target = $region33
    $region32: #{tpu_custom_call.1} parent=1 // pred_region
      %59 = dma.done [#allocation7], 2048
    $region33: #{tpu_custom_call.1} parent=1 // pred_fallthru
      _
    // Predicated region
    $region34: #{tpu_custom_call.1} parent=1 // pred_check
      _
    $region35: #{tpu_custom_call.1} parent=1 // pred_check_branch
      %61 = sbr.rel (0) target = $region37
    $region36: #{tpu_custom_call.1} parent=1 // pred_region
      %62 = dma.done [#allocation7], 1024
    $region37: #{tpu_custom_call.1} parent=1 // pred_fallthru
      _
    %p64 = scmp.eq.s32.totalorder 0, 0
    // Predicated region
    $region38: #{tpu_custom_call.1} parent=1 // pred_check
      %p65 = pneg %p64
    $region39: #{tpu_custom_call.1} parent=1 // pred_check_branch
      %67 = sbr.rel (%p65) target = $region41
    $region40: #{tpu_custom_call.1} parent=1 // pred_region
      %v68 = vld [vmem:[#allocation3] sm:$0xff]
      %69 = vst [vmem:[#allocation2] sm:$0xff] %v68
    $region41: #{tpu_custom_call.1} parent=1 // pred_fallthru
      _
    %v70 = vld [vmem:[#allocation2] sm:$0xff]
    %v71 = vpack.c.bf16 %v70, %v70
    %v72 = vld [vmem:[#allocation6] sm:$0xf]
    %v73 = vld [vmem:[#allocation6 + $0x4] sm:$0xf]
    %v74 = vld [vmem:[#allocation6 + $0x8] sm:$0xf]
    %v75 = vld [vmem:[#allocation6 + $0xc] sm:$0xf]
    %v76 = vld [vmem:[#allocation6 + $0x10] sm:$0xf]
    %v77 = vld [vmem:[#allocation6 + $0x14] sm:$0xf]
    %v78 = vld [vmem:[#allocation6 + $0x18] sm:$0xf]
    %v79 = vld [vmem:[#allocation6 + $0x1c] sm:$0xf]
    %v80 = vld [vmem:[#allocation6 + $0x20] sm:$0xf]
    %v81 = vld [vmem:[#allocation6 + $0x24] sm:$0xf]
    %v82 = vld [vmem:[#allocation6 + $0x28] sm:$0xf]
    %v83 = vld [vmem:[#allocation6 + $0x2c] sm:$0xf]
    %v84 = vld [vmem:[#allocation6 + $0x30] sm:$0xf]
    %v85 = vld [vmem:[#allocation6 + $0x34] sm:$0xf]
    %v86 = vld [vmem:[#allocation6 + $0x38] sm:$0xf]
    %v87 = vld [vmem:[#allocation6 + $0x3c] sm:$0xf]
    %v104 = vunpack.c.l.b16 %v72
    %v105 = vunpack.c.l.b16 %v73
    %v106 = vunpack.c.l.b16 %v74
    %v107 = vunpack.c.l.b16 %v75
    %v108 = vunpack.c.l.b16 %v76
    %v109 = vunpack.c.l.b16 %v77
    %v110 = vunpack.c.l.b16 %v78
    %v111 = vunpack.c.l.b16 %v79
    %v112 = vunpack.c.l.b16 %v80
    %v113 = vunpack.c.l.b16 %v81
    %v114 = vunpack.c.l.b16 %v82
    %v115 = vunpack.c.l.b16 %v83
    %v116 = vunpack.c.l.b16 %v84
    %v117 = vunpack.c.l.b16 %v85
    %v118 = vunpack.c.l.b16 %v86
    %v119 = vunpack.c.l.b16 %v87
    %v120 = vpack.c.b16 %v105, %v104
    %v121 = vpack.c.b16 %v107, %v106
    %v122 = vpack.c.b16 %v109, %v108
    %v123 = vpack.c.b16 %v111, %v110
    %v124 = vpack.c.b16 %v113, %v112
    %v125 = vpack.c.b16 %v115, %v114
    %v126 = vpack.c.b16 %v117, %v116
    %v127 = vpack.c.b16 %v119, %v118
    %136 = vmatprep.subr.bf16.mxu0 0
    %137 = vmatpush1.bf16.msra.mxu0 %v120
    %138 = vmatprep.subr.bf16.mxu0 0
    %139 = vmatpush1.bf16.msra.mxu0 %v121
    %140 = vmatprep.subr.bf16.mxu0 0
    %141 = vmatpush1.bf16.msra.mxu0 %v122
    %142 = vmatprep.subr.bf16.mxu0 0
    %143 = vmatpush1.bf16.msra.mxu0 %v123
    %144 = vmatprep.subr.bf16.mxu0 0
    %145 = vmatpush1.bf16.msra.mxu0 %v124
    %146 = vmatprep.subr.bf16.mxu0 0
    %147 = vmatpush1.bf16.msra.mxu0 %v125
    %148 = vmatprep.subr.bf16.mxu0 0
    %149 = vmatpush1.bf16.msra.mxu0 %v126
    %150 = vmatprep.subr.bf16.mxu0 0
    %151 = vmatpush1.bf16.msra.mxu0 %v127
    %152 = vmatprep.subr.bf16.mxu0 0
    %153 = vmatpush1.bf16.msra.mxu0 0
    %154 = vmatprep.subr.bf16.mxu0 0
    %155 = vmatpush1.bf16.msra.mxu0 0
    %156 = vmatprep.subr.bf16.mxu0 0
    %157 = vmatpush1.bf16.msra.mxu0 0
    %158 = vmatprep.subr.bf16.mxu0 0
    %159 = vmatpush1.bf16.msra.mxu0 0
    %160 = vmatprep.subr.bf16.mxu0 0
    %161 = vmatpush1.bf16.msra.mxu0 0
    %162 = vmatprep.subr.bf16.mxu0 0
    %163 = vmatpush1.bf16.msra.mxu0 0
    %164 = vmatprep.subr.bf16.mxu0 0
    %165 = vmatpush1.bf16.msra.mxu0 0
    %166 = vmatprep.subr.bf16.mxu0 0
    %167 = vmatpush1.bf16.msra.mxu0 0
    %168 = vmatprep.mubr.bf16.mxu0 0
    %169 = vmatmul.mubr.bf16.gmra.mrb[0].mxu0 %v71
    %v170 = vpop.f32.mrb[0].mxu0
    %v171 = vadd.f32 0.0, %v170
    %v172 = vpop.f32.mrb[0].mxu0
    %v173 = vpop.f32.mrb[0].mxu0
    %v174 = vpop.f32.mrb[0].mxu0
    %175 = vdwg.mxu0
    %v176 = vrot.slane %v171, 4
    %v177 = vadd.f32 %v171, %v176
    %v178 = vrot.slane %v177, 2
    %v179 = vadd.f32 %v177, %v178
    %v180 = vrot.slane %v179, 1
    %v181 = vadd.f32 %v179, %v180
    %v182 = vrcp.pop 8.0
    %v183 = vmul.f32 %v181, %v182
    %v184 = vsub.f32 %v171, %v183
    %v185 = vmul.f32 %v184, %v184
    %v186 = vrot.slane %v185, 4
    %v187 = vadd.f32 %v185, %v186
    %v188 = vrot.slane %v187, 2
    %v189 = vadd.f32 %v187, %v188
    %v190 = vrot.slane %v189, 1
    %v191 = vadd.f32 %v189, %v190
    %v192 = vmul.f32 %v191, %v182
    %v193 = vld [vmem:[%s2] sm:$0x1]
    %v194 = vadd.f32 %v192, 1e-05
    %v195 = vrsqrt.pop %v194
    %v196 = vmul.f32 %v193, %v195
    %v197 = vld [vmem:[%s3] sm:$0x1]
    %v198 = vmul.f32 %v183, %v196
    %v199 = vsub.f32 %v197, %v198
    %v201 = vlaneseq
    %v202 = vshrl.u32 %v201, 7
    %v203 = vsub.s32 0, %v202
    %v204 = vrot.slane %v196, %v203
    %v206 = vmul.f32 %v171, %v204
    %v208 = vlaneseq
    %v209 = vshrl.u32 %v208, 7
    %v210 = vsub.s32 0, %v209
    %v211 = vrot.slane %v199, %v210
    %v213 = vadd.f32 %v206, %v211
    %v214 = vxor.u32 %v213, 2147483648
    %v215 = vmul.f32 %v214, 1.442695
    %v216 = vpow.pop %v215
    %v217 = vadd.f32 %v216, 1.0
    %v218 = vrcp.pop %v217
    %v219 = vmul.f32 1.0, %v218
    %v220 = vmul.f32 %v213, %v219
    %v221 = vpack.c.bf16 %v220, %v220
    %s222 = scalar_lea.vmem [#allocation6], 64
    %v223 = vld [vmem:[%s222] sm:$0xf]
    %v224 = vld [vmem:[%s222 + $0x4] sm:$0xf]
    %v225 = vld [vmem:[%s222 + $0x8] sm:$0xf]
    %v226 = vld [vmem:[%s222 + $0xc] sm:$0xf]
    %v227 = vld [vmem:[%s222 + $0x10] sm:$0xf]
    %v228 = vld [vmem:[%s222 + $0x14] sm:$0xf]
    %v229 = vld [vmem:[%s222 + $0x18] sm:$0xf]
    %v230 = vld [vmem:[%s222 + $0x1c] sm:$0xf]
    %v231 = vld [vmem:[%s222 + $0x20] sm:$0xf]
    %v232 = vld [vmem:[%s222 + $0x24] sm:$0xf]
    %v233 = vld [vmem:[%s222 + $0x28] sm:$0xf]
    %v234 = vld [vmem:[%s222 + $0x2c] sm:$0xf]
    %v235 = vld [vmem:[%s222 + $0x30] sm:$0xf]
    %v236 = vld [vmem:[%s222 + $0x34] sm:$0xf]
    %v237 = vld [vmem:[%s222 + $0x38] sm:$0xf]
    %v238 = vld [vmem:[%s222 + $0x3c] sm:$0xf]
    %v255 = vunpack.c.l.b16 %v223
    %v256 = vunpack.c.l.b16 %v224
    %v257 = vunpack.c.l.b16 %v225
    %v258 = vunpack.c.l.b16 %v226
    %v259 = vunpack.c.l.b16 %v227
    %v260 = vunpack.c.l.b16 %v228
    %v261 = vunpack.c.l.b16 %v229
    %v262 = vunpack.c.l.b16 %v230
    %v263 = vunpack.c.l.b16 %v231
    %v264 = vunpack.c.l.b16 %v232
    %v265 = vunpack.c.l.b16 %v233
    %v266 = vunpack.c.l.b16 %v234
    %v267 = vunpack.c.l.b16 %v235
    %v268 = vunpack.c.l.b16 %v236
    %v269 = vunpack.c.l.b16 %v237
    %v270 = vunpack.c.l.b16 %v238
    %v271 = vpack.c.b16 %v256, %v255
    %v272 = vpack.c.b16 %v258, %v257
    %v273 = vpack.c.b16 %v260, %v259
    %v274 = vpack.c.b16 %v262, %v261
    %v275 = vpack.c.b16 %v264, %v263
    %v276 = vpack.c.b16 %v266, %v265
    %v277 = vpack.c.b16 %v268, %v267
    %v278 = vpack.c.b16 %v270, %v269
    %287 = vmatprep.subr.bf16.mxu0 0
    %288 = vmatpush1.bf16.msra.mxu0 %v271
    %289 = vmatprep.subr.bf16.mxu0 0
    %290 = vmatpush1.bf16.msra.mxu0 %v272
    %291 = vmatprep.subr.bf16.mxu0 0
    %292 = vmatpush1.bf16.msra.mxu0 %v273
    %293 = vmatprep.subr.bf16.mxu0 0
    %294 = vmatpush1.bf16.msra.mxu0 %v274
    %295 = vmatprep.subr.bf16.mxu0 0
    %296 = vmatpush1.bf16.msra.mxu0 %v275
    %297 = vmatprep.subr.bf16.mxu0 0
    %298 = vmatpush1.bf16.msra.mxu0 %v276
    %299 = vmatprep.subr.bf16.mxu0 0
    %300 = vmatpush1.bf16.msra.mxu0 %v277
    %301 = vmatprep.subr.bf16.mxu0 0
    %302 = vmatpush1.bf16.msra.mxu0 %v278
    %303 = vmatprep.subr.bf16.mxu0 0
    %304 = vmatpush1.bf16.msra.mxu0 0
    %305 = vmatprep.subr.bf16.mxu0 0
    %306 = vmatpush1.bf16.msra.mxu0 0
    %307 = vmatprep.subr.bf16.mxu0 0
    %308 = vmatpush1.bf16.msra.mxu0 0
    %309 = vmatprep.subr.bf16.mxu0 0
    %310 = vmatpush1.bf16.msra.mxu0 0
    %311 = vmatprep.subr.bf16.mxu0 0
    %312 = vmatpush1.bf16.msra.mxu0 0
    %313 = vmatprep.subr.bf16.mxu0 0
    %314 = vmatpush1.bf16.msra.mxu0 0
    %315 = vmatprep.subr.bf16.mxu0 0
    %316 = vmatpush1.bf16.msra.mxu0 0
    %317 = vmatprep.subr.bf16.mxu0 0
    %318 = vmatpush1.bf16.msra.mxu0 0
    %319 = vmatprep.mubr.bf16.mxu0 0
    %320 = vmatmul.mubr.bf16.gmra.mrb[0].mxu0 %v221
    %v321 = vpop.f32.mrb[0].mxu0
    %v322 = vadd.f32 0.0, %v321
    %v323 = vpop.f32.mrb[0].mxu0
    %v324 = vpop.f32.mrb[0].mxu0
    %v325 = vpop.f32.mrb[0].mxu0
    %326 = vdwg.mxu0
    %v327 = vrot.slane %v322, 4
    %v328 = vadd.f32 %v322, %v327
    %v329 = vrot.slane %v328, 2
    %v330 = vadd.f32 %v328, %v329
    %v331 = vrot.slane %v330, 1
    %v332 = vadd.f32 %v330, %v331
    %v333 = vmul.f32 %v332, %v182
    %v334 = vsub.f32 %v322, %v333
    %v335 = vmul.f32 %v334, %v334
    %v336 = vrot.slane %v335, 4
    %v337 = vadd.f32 %v335, %v336
    %v338 = vrot.slane %v337, 2
    %v339 = vadd.f32 %v337, %v338
    %v340 = vrot.slane %v339, 1
    %v341 = vadd.f32 %v339, %v340
    %v342 = vmul.f32 %v341, %v182
    %s343 = scalar_lea.vmem %s2, 1
    %v344 = vld [vmem:[%s343] sm:$0x1]
    %v345 = vadd.f32 %v342, 1e-05
    %v346 = vrsqrt.pop %v345
    %v347 = vmul.f32 %v344, %v346
    %s348 = scalar_lea.vmem %s3, 1
    %v349 = vld [vmem:[%s348] sm:$0x1]
    %v350 = vmul.f32 %v333, %v347
    %v351 = vsub.f32 %v349, %v350
    %v353 = vlaneseq
    %v354 = vshrl.u32 %v353, 7
    %v355 = vsub.s32 0, %v354
    %v356 = vrot.slane %v347, %v355
    %v358 = vmul.f32 %v322, %v356
    %v360 = vlaneseq
    %v361 = vshrl.u32 %v360, 7
    %v362 = vsub.s32 0, %v361
    %v363 = vrot.slane %v351, %v362
    %v365 = vadd.f32 %v358, %v363
    %v366 = vxor.u32 %v365, 2147483648
    %v367 = vmul.f32 %v366, 1.442695
    %v368 = vpow.pop %v367
    %v369 = vadd.f32 %v368, 1.0
    %v370 = vrcp.pop %v369
    %v371 = vmul.f32 1.0, %v370
    %v372 = vmul.f32 %v365, %v371
    %373 = vst [vmem:[#allocation2] sm:$0xff] %v372
    // Predicated region
    $region42: #{tpu_custom_call.1} parent=1 // pred_check
      %p374 = pneg %p64
    $region43: #{tpu_custom_call.1} parent=1 // pred_check_branch
      %376 = sbr.rel (%p374) target = $region45
    $region44: #{tpu_custom_call.1} parent=1 // pred_region
      %v377 = vld [vmem:[#allocation2] sm:$0xff]
      %v378 = vpack.c.bf16 %v377, %v377
      %v379 = vld [vmem:[#allocation8] sm:$0xf]
      %v380 = vld [vmem:[#allocation8 + $0x4] sm:$0xf]
      %v381 = vld [vmem:[#allocation8 + $0x8] sm:$0xf]
      %v382 = vld [vmem:[#allocation8 + $0xc] sm:$0xf]
      %v383 = vld [vmem:[#allocation8 + $0x10] sm:$0xf]
      %v384 = vld [vmem:[#allocation8 + $0x14] sm:$0xf]
      %v385 = vld [vmem:[#allocation8 + $0x18] sm:$0xf]
      %v386 = vld [vmem:[#allocation8 + $0x1c] sm:$0xf]
      %v387 = vld [vmem:[#allocation8 + $0x20] sm:$0xf]
      %v388 = vld [vmem:[#allocation8 + $0x24] sm:$0xf]
      %v389 = vld [vmem:[#allocation8 + $0x28] sm:$0xf]
      %v390 = vld [vmem:[#allocation8 + $0x2c] sm:$0xf]
      %v391 = vld [vmem:[#allocation8 + $0x30] sm:$0xf]
      %v392 = vld [vmem:[#allocation8 + $0x34] sm:$0xf]
      %v393 = vld [vmem:[#allocation8 + $0x38] sm:$0xf]
      %v394 = vld [vmem:[#allocation8 + $0x3c] sm:$0xf]
      %v395 = vld [vmem:[%s5] sm:$0x1]
      %v397 = vlaneseq
      %v398 = vshrl.u32 %v397, 7
      %v399 = vsub.s32 0, %v398
      %v400 = vrot.slane %v395, %v399
      %v418 = vunpack.c.l.b16 %v379
      %v419 = vunpack.c.l.b16 %v380
      %v420 = vunpack.c.l.b16 %v381
      %v421 = vunpack.c.l.b16 %v382
      %v422 = vunpack.c.l.b16 %v383
      %v423 = vunpack.c.l.b16 %v384
      %v424 = vunpack.c.l.b16 %v385
      %v425 = vunpack.c.l.b16 %v386
      %v426 = vunpack.c.l.b16 %v387
      %v427 = vunpack.c.l.b16 %v388
      %v428 = vunpack.c.l.b16 %v389
      %v429 = vunpack.c.l.b16 %v390
      %v430 = vunpack.c.l.b16 %v391
      %v431 = vunpack.c.l.b16 %v392
      %v432 = vunpack.c.l.b16 %v393
      %v433 = vunpack.c.l.b16 %v394
      %v434 = vpack.c.b16 %v419, %v418
      %v435 = vpack.c.b16 %v421, %v420
      %v436 = vpack.c.b16 %v423, %v422
      %v437 = vpack.c.b16 %v425, %v424
      %v438 = vpack.c.b16 %v427, %v426
      %v439 = vpack.c.b16 %v429, %v428
      %v440 = vpack.c.b16 %v431, %v430
      %v441 = vpack.c.b16 %v433, %v432
      %450 = vmatprep.subr.bf16.mxu0 0
      %451 = vmatpush1.bf16.msra.mxu0 %v434
      %452 = vmatprep.subr.bf16.mxu0 0
      %453 = vmatpush1.bf16.msra.mxu0 %v435
      %454 = vmatprep.subr.bf16.mxu0 0
      %455 = vmatpush1.bf16.msra.mxu0 %v436
      %456 = vmatprep.subr.bf16.mxu0 0
      %457 = vmatpush1.bf16.msra.mxu0 %v437
      %458 = vmatprep.subr.bf16.mxu0 0
      %459 = vmatpush1.bf16.msra.mxu0 %v438
      %460 = vmatprep.subr.bf16.mxu0 0
      %461 = vmatpush1.bf16.msra.mxu0 %v439
      %462 = vmatprep.subr.bf16.mxu0 0
      %463 = vmatpush1.bf16.msra.mxu0 %v440
      %464 = vmatprep.subr.bf16.mxu0 0
      %465 = vmatpush1.bf16.msra.mxu0 %v441
      %466 = vmatprep.subr.bf16.mxu0 0
      %467 = vmatpush1.bf16.msra.mxu0 0
      %468 = vmatprep.subr.bf16.mxu0 0
      %469 = vmatpush1.bf16.msra.mxu0 0
      %470 = vmatprep.subr.bf16.mxu0 0
      %471 = vmatpush1.bf16.msra.mxu0 0
      %472 = vmatprep.subr.bf16.mxu0 0
      %473 = vmatpush1.bf16.msra.mxu0 0
      %474 = vmatprep.subr.bf16.mxu0 0
      %475 = vmatpush1.bf16.msra.mxu0 0
      %476 = vmatprep.subr.bf16.mxu0 0
      %477 = vmatpush1.bf16.msra.mxu0 0
      %478 = vmatprep.subr.bf16.mxu0 0
      %479 = vmatpush1.bf16.msra.mxu0 0
      %480 = vmatprep.subr.bf16.mxu0 0
      %481 = vmatpush1.bf16.msra.mxu0 0
      %482 = vmatprep.mubr.bf16.mxu0 0
      %483 = vmatmul.mubr.bf16.gmra.mrb[0].mxu0 %v378
      %v484 = vpop.f32.mrb[0].mxu0
      %v485 = vadd.f32 %v400, %v484
      %v486 = vpop.f32.mrb[0].mxu0
      %v487 = vpop.f32.mrb[0].mxu0
      %v488 = vpop.f32.mrb[0].mxu0
      %489 = vdwg.mxu0
      %490 = vst [vmem:[#allocation9] sm:$0xff] %v485
    $region45: #{tpu_custom_call.1} parent=1 // pred_fallthru
      _
    // Predicated region
    $region46: #{tpu_custom_call.1} parent=1 // pred_check
      _
    $region47: #{tpu_custom_call.1} parent=1 // pred_check_branch
      %492 = sbr.rel (0) target = $region49
    $region48: #{tpu_custom_call.1} parent=1 // pred_region
      %s494 = ssub.s32 128, 128
      %495 = vsyncadd [#allocation5], %s494
      %s497 = sshll.u32 [#allocation9], 4
      %s498 = int_to_ptr.vmem [resolvable:$true] %s497
      %500 = dma.vmem_to_hbm [thread:$0]  %s498, 128, %s6, [#allocation5]
    $region49: #{tpu_custom_call.1} parent=1 // pred_fallthru
      _
    // Predicated region
    $region50: #{tpu_custom_call.1} parent=1 // pred_check
      _
    $region51: #{tpu_custom_call.1} parent=1 // pred_check_branch
      %502 = sbr.rel (0) target = $region53
    $region52: #{tpu_custom_call.1} parent=1 // pred_region
      %503 = dma.done [#allocation5], 128
    $region53: #{tpu_custom_call.1} parent=1 // pred_fallthru
      _
    %504 = vsyncpa [#allocation4], 1
    %505 = vsyncpa [#allocation7], 1
    %506 = vsyncpa [#allocation5], 1

</llo_original>
